<compile_context>
chip_gen: v5e
topology: v5e:2x2
jax: 0.10.0
libtpu: 0.0.40
codegen_flags: <defaults>
</compile_context>

<pallas_src>
from itertools import permutations

import jax
import jax.numpy as jnp
from jax import lax
from jax.experimental import pallas as pl
from jax.experimental.pallas import tpu as pltpu

LANE = 128


def _round_up(a, b):
    return (a + b - 1) // b * b


def _make_selected_model_kernel(N, s_tile, chunk):
    """Kernel for ONE (argmax-selected) sub-model on one (s_tile, 128) tile."""
    eps = 1e-6
    n_chunks = s_tile // chunk
    pairs = list(permutations(range(N), 2))  # same order as the module

    def kernel(x_ref,          # VMEM (N, s_tile, 128)  features leading, dense tiles
               ord_beta_ref,   # SMEM (P,)   per ordered pair (i, j)
               ord_thr_ref,    # SMEM (P,)
               mo_w_ref,       # SMEM (P,)   Multiorder weights (softmax)
               clk_beta_ref,   # SMEM (N,)
               clk_thr_ref,    # SMEM (N,)
               conj_w_ref,     # SMEM (N+1,)
               disj_w_ref,     # SMEM (N+1,)
               alpha_ref,      # SMEM (1,)   Binary gate alpha in [0, 1]
               beta_ref,       # SMEM (1,)   Multi_model betas[0]
               out_ref):       # VMEM (s_tile, 128)
        alpha = alpha_ref[0]
        beta = beta_ref[0]
        cw0 = conj_w_ref[0]
        dw0 = disj_w_ref[0]

        def chunk_body(r0):
            x = x_ref[:, pl.ds(r0, chunk), :].astype(jnp.float32)  # (N, chunk, 128)

            # --- Order_module + Multiorder_Module (weighted soft predicates) --
            # sigmoid(z) = 0.5*(1 + tanh(0.5*z)): 1 EUP push per vreg, exact.
            rn = jnp.zeros((chunk, LANE), jnp.float32)
            for p, (i, j) in enumerate(pairs):
                z = ord_beta_ref[p] * (x[i] - x[j] - ord_thr_ref[p])
                rn = rn + mo_w_ref[p] * (0.5 + 0.5 * jnp.tanh(0.5 * z))
            rn = jnp.clip(rn, 0.0, 1.0)          # guard log(1 - rn + eps)

            # --- Predicate_time + TimeorderConj/Disj in the log domain -------
            # r = sigmoid(z): log r = -softplus(-z); log(1-r) = -(z+softplus(-z))
            log_conj = cw0 * jnp.log(rn + eps)
            log_ndisj = dw0 * jnp.log(1.0 - rn + eps)
            for n in range(N):
                z = clk_beta_ref[n] * (x[n] - clk_thr_ref[n])
                sp = jnp.maximum(-z, 0.0) + jnp.log(
                    1.0 + jnp.exp(-jnp.abs(z)))   # softplus(-z), 2 EUP/elem
                log_conj = log_conj - conj_w_ref[n + 1] * sp
                log_ndisj = log_ndisj - disj_w_ref[n + 1] * (z + sp)
            ret_conj = jnp.exp(log_conj)
            ret_disj = 1.0 - jnp.exp(log_ndisj)

            # --- Binary gate + fused Multi_model epilogue exp(ret + beta) ----
            ret = alpha * ret_conj + (1.0 - alpha) * ret_disj
            out_ref[pl.ds(r0, chunk), :] = jnp.exp(ret + beta)

        if n_chunks == 1:
            chunk_body(0)
        else:
            def loop_body(c, carry):
                chunk_body(pl.multiple_of(c * chunk, chunk))
                return carry
            lax.fori_loop(0, n_chunks, loop_body, 0, unroll=True)

    return kernel


def multi_model_forward(x_btn, params):
    """Forward pass of Multi_model.  x_btn: (B, T, fea_N) float32 -> (B, T)."""
    B, T, N = x_btn.shape
    L = B * T
    P = N * (N - 1)

    # Multi_model's hard one-hot selection (argmax over `weights`) does not
    # depend on x -> select the winning sub-model BEFORE the kernel launch.
    m = jnp.argmax(params["weights"][0])
    sel = lambda a: jnp.take(a, m, axis=0)

    ord_beta = sel(params["ord_beta"]).astype(jnp.float32)   # (P,)
    ord_thr = sel(params["ord_thr"]).astype(jnp.float32)     # (P,)
    mo_w = sel(params["mo_w"]).astype(jnp.float32)           # (P,)
    clk_beta = sel(params["clk_beta"]).astype(jnp.float32)   # (N,)
    clk_thr = sel(params["clk_thr"]).astype(jnp.float32)     # (N,)
    conj_w = sel(params["conj_w"]).astype(jnp.float32)       # (N+1,)
    disj_w = sel(params["disj_w"]).astype(jnp.float32)       # (N+1,)
    alpha = sel(params["alpha"]).reshape(1).astype(jnp.float32)
    betas = params["betas"].reshape(1).astype(jnp.float32)

    # Dense layout: features leading, B*T folded into (rows, 128) lane tiles.
    # TODO(synk): have the producer emit x as (fea_N, B*T) to avoid this
    # wrapper transpose (one extra HBM round trip of x).
    x_nl = jnp.transpose(x_btn, (2, 0, 1)).reshape(N, L).astype(jnp.float32)

    # Tile selection: pick the row-tile first, then pad rows up to a multiple
    # of it.  Keep >=2 grid steps when B*T is big enough (v7x megacore).
    rows = max(1, pl.cdiv(L, LANE))
    rows8 = _round_up(rows, 8)
    if rows8 <= 8:
        s_tile = rows8
    elif rows8 <= 128:
        s_tile = _round_up((rows8 + 1) // 2, 8)
    else:
        s_tile = 64
    s_total = _round_up(rows8, s_tile)
    grid = s_total // s_tile
    chunk = 16 if s_tile % 16 == 0 else 8

    L_pad = s_total * LANE
    if L_pad != L:
        x_nl = jnp.pad(x_nl, ((0, 0), (0, L_pad - L)))
    x_3d = x_nl.reshape(N, s_total, LANE)

    kernel = _make_selected_model_kernel(N, s_tile, chunk)
    smem = lambda n: pl.BlockSpec((n,), lambda t: (0,),
                                  memory_space=pltpu.MemorySpace.SMEM)

    out = pl.pallas_call(
        kernel,
        out_shape=jax.ShapeDtypeStruct((s_total, LANE), jnp.float32),
        grid=(grid,),
        in_specs=[
            pl.BlockSpec((N, s_tile, LANE), lambda t: (0, t, 0)),   # x tile
            smem(P), smem(P), smem(P),                              # order params
            smem(N), smem(N),                                       # clock params
            smem(N + 1), smem(N + 1),                               # conj/disj w
            smem(1), smem(1),                                       # alpha, beta
        ],
        out_specs=pl.BlockSpec((s_tile, LANE), lambda t: (t, 0)),
        compiler_params=pltpu.CompilerParams(
            dimension_semantics=("parallel",)),
    )(x_3d, ord_beta, ord_thr, mo_w, clk_beta, clk_thr, conj_w, disj_w,
      alpha, betas)

    return out.reshape(-1)[:L].reshape(B, T)


def init_params(key, n_model, fea_n):
    """Deterministic synthetic parameters (shapes follow the module __init__)."""
    P = fea_n * (fea_n - 1)
    ks = jax.random.split(key, 10)
    ord_beta = 1.0 + jax.random.uniform(ks[0], (n_model, P), jnp.float32)
    ord_thr = 0.2 * jax.random.normal(ks[1], (n_model, P), jnp.float32)
    mo_w = jax.nn.softmax(
        jax.random.normal(ks[2], (n_model, P), jnp.float32), axis=-1)
    clk_beta = 1.0 + jax.random.uniform(ks[3], (n_model, fea_n), jnp.float32)
    clk_thr = 0.2 * jax.random.normal(ks[4], (n_model, fea_n), jnp.float32)
    conj_w = jax.random.uniform(ks[5], (n_model, fea_n + 1), jnp.float32)
    disj_w = jax.random.uniform(ks[6], (n_model, fea_n + 1), jnp.float32)
    alpha = jax.nn.sigmoid(jax.random.normal(ks[7], (n_model,), jnp.float32))
    # Multi_model's own parameters:
    weights = jax.random.normal(ks[8], (1, n_model), jnp.float32)   # randn
    betas = jax.random.uniform(ks[9], (1,), jnp.float32)            # rand
    return dict(ord_beta=ord_beta, ord_thr=ord_thr, mo_w=mo_w,
                clk_beta=clk_beta, clk_thr=clk_thr,
                conj_w=conj_w, disj_w=disj_w, alpha=alpha,
                weights=weights, betas=betas)


if __name__ == "__main__":
    # Small shapes consistent with Multi_model(N_model, fea_N, T):
    N_MODEL, FEA_N, T, B = 3, 4, 8, 2
    key = jax.random.PRNGKey(0)
    k_x, k_p = jax.random.split(key)
    x = jax.random.normal(k_x, (B, T, FEA_N), jnp.float32)   # (batch, time, events)
    params = init_params(k_p, N_MODEL, FEA_N)

    out = multi_model_forward(x, params)
    out = jax.block_until_ready(out)
    assert out.shape == (B, T)
    assert bool(jnp.all(jnp.isfinite(out)))
    print("KERNEL_OK")
</pallas_src>

<mosaic_0001>
module attributes {stable_mosaic.version = 11 : i64} {
  func.func @kernel(%arg0: i32, %arg1: memref<4x8x128xf32, #tpu.memory_space<vmem>>, %arg2: memref<12xf32, #tpu.memory_space<smem>>, %arg3: memref<12xf32, #tpu.memory_space<smem>>, %arg4: memref<12xf32, #tpu.memory_space<smem>>, %arg5: memref<4xf32, #tpu.memory_space<smem>>, %arg6: memref<4xf32, #tpu.memory_space<smem>>, %arg7: memref<5xf32, #tpu.memory_space<smem>>, %arg8: memref<5xf32, #tpu.memory_space<smem>>, %arg9: memref<1xf32, #tpu.memory_space<smem>>, %arg10: memref<1xf32, #tpu.memory_space<smem>>, %arg11: memref<8x128xf32, #tpu.memory_space<vmem>>) attributes {dimension_semantics = [#tpu.dimension_semantics<parallel>], iteration_bounds = array<i64: 1>, scalar_prefetch = 0 : i64, scratch_operands = 0 : i64, tpu.core_type = #tpu.core_type<tc>, window_params = [{transform_indices = @transform_0, window_bounds = array<i64: 4, 8, 128>}, {transform_indices = @transform_1, window_bounds = array<i64: 12>}, {transform_indices = @transform_2, window_bounds = array<i64: 12>}, {transform_indices = @transform_3, window_bounds = array<i64: 12>}, {transform_indices = @transform_4, window_bounds = array<i64: 4>}, {transform_indices = @transform_5, window_bounds = array<i64: 4>}, {transform_indices = @transform_6, window_bounds = array<i64: 5>}, {transform_indices = @transform_7, window_bounds = array<i64: 5>}, {transform_indices = @transform_8, window_bounds = array<i64: 1>}, {transform_indices = @transform_9, window_bounds = array<i64: 1>}, {transform_indices = @transform_10, window_bounds = array<i64: 8, 128>}]} {
    %c0 = arith.constant 0 : index
    %0 = memref.load %arg9[%c0] : memref<1xf32, #tpu.memory_space<smem>>
    %c0_0 = arith.constant 0 : index
    %1 = memref.load %arg10[%c0_0] : memref<1xf32, #tpu.memory_space<smem>>
    %c0_1 = arith.constant 0 : index
    %2 = memref.load %arg7[%c0_1] : memref<5xf32, #tpu.memory_space<smem>>
    %c0_2 = arith.constant 0 : index
    %3 = memref.load %arg8[%c0_2] : memref<5xf32, #tpu.memory_space<smem>>
    %c0_3 = arith.constant 0 : index
    %c0_4 = arith.constant 0 : index
    %c0_5 = arith.constant 0 : index
    %4 = vector.load %arg1[%c0_3, %c0_4, %c0_5] : memref<4x8x128xf32, #tpu.memory_space<vmem>>, vector<4x8x128xf32>
    %cst = arith.constant 0.000000e+00 : f32
    %5 = vector.broadcast %cst : f32 to vector<8x128xf32>
    %c0_6 = arith.constant 0 : index
    %6 = memref.load %arg2[%c0_6] : memref<12xf32, #tpu.memory_space<smem>>
    %7 = vector.extract_strided_slice %4 {offsets = [0, 0, 0], sizes = [1, 8, 128], strides = [1, 1, 1]} : vector<4x8x128xf32> to vector<1x8x128xf32>
    %8 = vector.shape_cast %7 : vector<1x8x128xf32> to vector<8x128xf32>
    %9 = vector.extract_strided_slice %4 {offsets = [1, 0, 0], sizes = [1, 8, 128], strides = [1, 1, 1]} : vector<4x8x128xf32> to vector<1x8x128xf32>
    %10 = vector.shape_cast %9 : vector<1x8x128xf32> to vector<8x128xf32>
    %11 = arith.subf %8, %10 : vector<8x128xf32>
    %c0_7 = arith.constant 0 : index
    %12 = memref.load %arg3[%c0_7] : memref<12xf32, #tpu.memory_space<smem>>
    %13 = vector.broadcast %12 : f32 to vector<8x128xf32>
    %14 = arith.subf %11, %13 : vector<8x128xf32>
    %15 = vector.broadcast %6 : f32 to vector<8x128xf32>
    %16 = arith.mulf %15, %14 : vector<8x128xf32>
    %c0_8 = arith.constant 0 : index
    %17 = memref.load %arg4[%c0_8] : memref<12xf32, #tpu.memory_space<smem>>
    %cst_9 = arith.constant 5.000000e-01 : f32
    %18 = vector.broadcast %cst_9 : f32 to vector<8x128xf32>
    %19 = arith.mulf %18, %16 : vector<8x128xf32>
    %20 = math.tanh %19 : vector<8x128xf32>
    %cst_10 = arith.constant 5.000000e-01 : f32
    %21 = vector.broadcast %cst_10 : f32 to vector<8x128xf32>
    %22 = arith.mulf %21, %20 : vector<8x128xf32>
    %cst_11 = arith.constant 5.000000e-01 : f32
    %23 = vector.broadcast %cst_11 : f32 to vector<8x128xf32>
    %24 = arith.addf %23, %22 : vector<8x128xf32>
    %25 = vector.broadcast %17 : f32 to vector<8x128xf32>
    %26 = arith.mulf %25, %24 : vector<8x128xf32>
    %27 = arith.addf %5, %26 : vector<8x128xf32>
    %c1 = arith.constant 1 : index
    %28 = memref.load %arg2[%c1] : memref<12xf32, #tpu.memory_space<smem>>
    %29 = vector.extract_strided_slice %4 {offsets = [0, 0, 0], sizes = [1, 8, 128], strides = [1, 1, 1]} : vector<4x8x128xf32> to vector<1x8x128xf32>
    %30 = vector.shape_cast %29 : vector<1x8x128xf32> to vector<8x128xf32>
    %31 = vector.extract_strided_slice %4 {offsets = [2, 0, 0], sizes = [1, 8, 128], strides = [1, 1, 1]} : vector<4x8x128xf32> to vector<1x8x128xf32>
    %32 = vector.shape_cast %31 : vector<1x8x128xf32> to vector<8x128xf32>
    %33 = arith.subf %30, %32 : vector<8x128xf32>
    %c1_12 = arith.constant 1 : index
    %34 = memref.load %arg3[%c1_12] : memref<12xf32, #tpu.memory_space<smem>>
    %35 = vector.broadcast %34 : f32 to vector<8x128xf32>
    %36 = arith.subf %33, %35 : vector<8x128xf32>
    %37 = vector.broadcast %28 : f32 to vector<8x128xf32>
    %38 = arith.mulf %37, %36 : vector<8x128xf32>
    %c1_13 = arith.constant 1 : index
    %39 = memref.load %arg4[%c1_13] : memref<12xf32, #tpu.memory_space<smem>>
    %cst_14 = arith.constant 5.000000e-01 : f32
    %40 = vector.broadcast %cst_14 : f32 to vector<8x128xf32>
    %41 = arith.mulf %40, %38 : vector<8x128xf32>
    %42 = math.tanh %41 : vector<8x128xf32>
    %cst_15 = arith.constant 5.000000e-01 : f32
    %43 = vector.broadcast %cst_15 : f32 to vector<8x128xf32>
    %44 = arith.mulf %43, %42 : vector<8x128xf32>
    %cst_16 = arith.constant 5.000000e-01 : f32
    %45 = vector.broadcast %cst_16 : f32 to vector<8x128xf32>
    %46 = arith.addf %45, %44 : vector<8x128xf32>
    %47 = vector.broadcast %39 : f32 to vector<8x128xf32>
    %48 = arith.mulf %47, %46 : vector<8x128xf32>
    %49 = arith.addf %27, %48 : vector<8x128xf32>
    %c2 = arith.constant 2 : index
    %50 = memref.load %arg2[%c2] : memref<12xf32, #tpu.memory_space<smem>>
    %51 = vector.extract_strided_slice %4 {offsets = [0, 0, 0], sizes = [1, 8, 128], strides = [1, 1, 1]} : vector<4x8x128xf32> to vector<1x8x128xf32>
    %52 = vector.shape_cast %51 : vector<1x8x128xf32> to vector<8x128xf32>
    %53 = vector.extract_strided_slice %4 {offsets = [3, 0, 0], sizes = [1, 8, 128], strides = [1, 1, 1]} : vector<4x8x128xf32> to vector<1x8x128xf32>
    %54 = vector.shape_cast %53 : vector<1x8x128xf32> to vector<8x128xf32>
    %55 = arith.subf %52, %54 : vector<8x128xf32>
    %c2_17 = arith.constant 2 : index
    %56 = memref.load %arg3[%c2_17] : memref<12xf32, #tpu.memory_space<smem>>
    %57 = vector.broadcast %56 : f32 to vector<8x128xf32>
    %58 = arith.subf %55, %57 : vector<8x128xf32>
    %59 = vector.broadcast %50 : f32 to vector<8x128xf32>
    %60 = arith.mulf %59, %58 : vector<8x128xf32>
    %c2_18 = arith.constant 2 : index
    %61 = memref.load %arg4[%c2_18] : memref<12xf32, #tpu.memory_space<smem>>
    %cst_19 = arith.constant 5.000000e-01 : f32
    %62 = vector.broadcast %cst_19 : f32 to vector<8x128xf32>
    %63 = arith.mulf %62, %60 : vector<8x128xf32>
    %64 = math.tanh %63 : vector<8x128xf32>
    %cst_20 = arith.constant 5.000000e-01 : f32
    %65 = vector.broadcast %cst_20 : f32 to vector<8x128xf32>
    %66 = arith.mulf %65, %64 : vector<8x128xf32>
    %cst_21 = arith.constant 5.000000e-01 : f32
    %67 = vector.broadcast %cst_21 : f32 to vector<8x128xf32>
    %68 = arith.addf %67, %66 : vector<8x128xf32>
    %69 = vector.broadcast %61 : f32 to vector<8x128xf32>
    %70 = arith.mulf %69, %68 : vector<8x128xf32>
    %71 = arith.addf %49, %70 : vector<8x128xf32>
    %c3 = arith.constant 3 : index
    %72 = memref.load %arg2[%c3] : memref<12xf32, #tpu.memory_space<smem>>
    %73 = vector.extract_strided_slice %4 {offsets = [1, 0, 0], sizes = [1, 8, 128], strides = [1, 1, 1]} : vector<4x8x128xf32> to vector<1x8x128xf32>
    %74 = vector.shape_cast %73 : vector<1x8x128xf32> to vector<8x128xf32>
    %75 = vector.extract_strided_slice %4 {offsets = [0, 0, 0], sizes = [1, 8, 128], strides = [1, 1, 1]} : vector<4x8x128xf32> to vector<1x8x128xf32>
    %76 = vector.shape_cast %75 : vector<1x8x128xf32> to vector<8x128xf32>
    %77 = arith.subf %74, %76 : vector<8x128xf32>
    %c3_22 = arith.constant 3 : index
    %78 = memref.load %arg3[%c3_22] : memref<12xf32, #tpu.memory_space<smem>>
    %79 = vector.broadcast %78 : f32 to vector<8x128xf32>
    %80 = arith.subf %77, %79 : vector<8x128xf32>
    %81 = vector.broadcast %72 : f32 to vector<8x128xf32>
    %82 = arith.mulf %81, %80 : vector<8x128xf32>
    %c3_23 = arith.constant 3 : index
    %83 = memref.load %arg4[%c3_23] : memref<12xf32, #tpu.memory_space<smem>>
    %cst_24 = arith.constant 5.000000e-01 : f32
    %84 = vector.broadcast %cst_24 : f32 to vector<8x128xf32>
    %85 = arith.mulf %84, %82 : vector<8x128xf32>
    %86 = math.tanh %85 : vector<8x128xf32>
    %cst_25 = arith.constant 5.000000e-01 : f32
    %87 = vector.broadcast %cst_25 : f32 to vector<8x128xf32>
    %88 = arith.mulf %87, %86 : vector<8x128xf32>
    %cst_26 = arith.constant 5.000000e-01 : f32
    %89 = vector.broadcast %cst_26 : f32 to vector<8x128xf32>
    %90 = arith.addf %89, %88 : vector<8x128xf32>
    %91 = vector.broadcast %83 : f32 to vector<8x128xf32>
    %92 = arith.mulf %91, %90 : vector<8x128xf32>
    %93 = arith.addf %71, %92 : vector<8x128xf32>
    %c4 = arith.constant 4 : index
    %94 = memref.load %arg2[%c4] : memref<12xf32, #tpu.memory_space<smem>>
    %95 = vector.extract_strided_slice %4 {offsets = [1, 0, 0], sizes = [1, 8, 128], strides = [1, 1, 1]} : vector<4x8x128xf32> to vector<1x8x128xf32>
    %96 = vector.shape_cast %95 : vector<1x8x128xf32> to vector<8x128xf32>
    %97 = vector.extract_strided_slice %4 {offsets = [2, 0, 0], sizes = [1, 8, 128], strides = [1, 1, 1]} : vector<4x8x128xf32> to vector<1x8x128xf32>
    %98 = vector.shape_cast %97 : vector<1x8x128xf32> to vector<8x128xf32>
    %99 = arith.subf %96, %98 : vector<8x128xf32>
    %c4_27 = arith.constant 4 : index
    %100 = memref.load %arg3[%c4_27] : memref<12xf32, #tpu.memory_space<smem>>
    %101 = vector.broadcast %100 : f32 to vector<8x128xf32>
    %102 = arith.subf %99, %101 : vector<8x128xf32>
    %103 = vector.broadcast %94 : f32 to vector<8x128xf32>
    %104 = arith.mulf %103, %102 : vector<8x128xf32>
    %c4_28 = arith.constant 4 : index
    %105 = memref.load %arg4[%c4_28] : memref<12xf32, #tpu.memory_space<smem>>
    %cst_29 = arith.constant 5.000000e-01 : f32
    %106 = vector.broadcast %cst_29 : f32 to vector<8x128xf32>
    %107 = arith.mulf %106, %104 : vector<8x128xf32>
    %108 = math.tanh %107 : vector<8x128xf32>
    %cst_30 = arith.constant 5.000000e-01 : f32
    %109 = vector.broadcast %cst_30 : f32 to vector<8x128xf32>
    %110 = arith.mulf %109, %108 : vector<8x128xf32>
    %cst_31 = arith.constant 5.000000e-01 : f32
    %111 = vector.broadcast %cst_31 : f32 to vector<8x128xf32>
    %112 = arith.addf %111, %110 : vector<8x128xf32>
    %113 = vector.broadcast %105 : f32 to vector<8x128xf32>
    %114 = arith.mulf %113, %112 : vector<8x128xf32>
    %115 = arith.addf %93, %114 : vector<8x128xf32>
    %c5 = arith.constant 5 : index
    %116 = memref.load %arg2[%c5] : memref<12xf32, #tpu.memory_space<smem>>
    %117 = vector.extract_strided_slice %4 {offsets = [1, 0, 0], sizes = [1, 8, 128], strides = [1, 1, 1]} : vector<4x8x128xf32> to vector<1x8x128xf32>
    %118 = vector.shape_cast %117 : vector<1x8x128xf32> to vector<8x128xf32>
    %119 = vector.extract_strided_slice %4 {offsets = [3, 0, 0], sizes = [1, 8, 128], strides = [1, 1, 1]} : vector<4x8x128xf32> to vector<1x8x128xf32>
    %120 = vector.shape_cast %119 : vector<1x8x128xf32> to vector<8x128xf32>
    %121 = arith.subf %118, %120 : vector<8x128xf32>
    %c5_32 = arith.constant 5 : index
    %122 = memref.load %arg3[%c5_32] : memref<12xf32, #tpu.memory_space<smem>>
    %123 = vector.broadcast %122 : f32 to vector<8x128xf32>
    %124 = arith.subf %121, %123 : vector<8x128xf32>
    %125 = vector.broadcast %116 : f32 to vector<8x128xf32>
    %126 = arith.mulf %125, %124 : vector<8x128xf32>
    %c5_33 = arith.constant 5 : index
    %127 = memref.load %arg4[%c5_33] : memref<12xf32, #tpu.memory_space<smem>>
    %cst_34 = arith.constant 5.000000e-01 : f32
    %128 = vector.broadcast %cst_34 : f32 to vector<8x128xf32>
    %129 = arith.mulf %128, %126 : vector<8x128xf32>
    %130 = math.tanh %129 : vector<8x128xf32>
    %cst_35 = arith.constant 5.000000e-01 : f32
    %131 = vector.broadcast %cst_35 : f32 to vector<8x128xf32>
    %132 = arith.mulf %131, %130 : vector<8x128xf32>
    %cst_36 = arith.constant 5.000000e-01 : f32
    %133 = vector.broadcast %cst_36 : f32 to vector<8x128xf32>
    %134 = arith.addf %133, %132 : vector<8x128xf32>
    %135 = vector.broadcast %127 : f32 to vector<8x128xf32>
    %136 = arith.mulf %135, %134 : vector<8x128xf32>
    %137 = arith.addf %115, %136 : vector<8x128xf32>
    %c6 = arith.constant 6 : index
    %138 = memref.load %arg2[%c6] : memref<12xf32, #tpu.memory_space<smem>>
    %139 = vector.extract_strided_slice %4 {offsets = [2, 0, 0], sizes = [1, 8, 128], strides = [1, 1, 1]} : vector<4x8x128xf32> to vector<1x8x128xf32>
    %140 = vector.shape_cast %139 : vector<1x8x128xf32> to vector<8x128xf32>
    %141 = vector.extract_strided_slice %4 {offsets = [0, 0, 0], sizes = [1, 8, 128], strides = [1, 1, 1]} : vector<4x8x128xf32> to vector<1x8x128xf32>
    %142 = vector.shape_cast %141 : vector<1x8x128xf32> to vector<8x128xf32>
    %143 = arith.subf %140, %142 : vector<8x128xf32>
    %c6_37 = arith.constant 6 : index
    %144 = memref.load %arg3[%c6_37] : memref<12xf32, #tpu.memory_space<smem>>
    %145 = vector.broadcast %144 : f32 to vector<8x128xf32>
    %146 = arith.subf %143, %145 : vector<8x128xf32>
    %147 = vector.broadcast %138 : f32 to vector<8x128xf32>
    %148 = arith.mulf %147, %146 : vector<8x128xf32>
    %c6_38 = arith.constant 6 : index
    %149 = memref.load %arg4[%c6_38] : memref<12xf32, #tpu.memory_space<smem>>
    %cst_39 = arith.constant 5.000000e-01 : f32
    %150 = vector.broadcast %cst_39 : f32 to vector<8x128xf32>
    %151 = arith.mulf %150, %148 : vector<8x128xf32>
    %152 = math.tanh %151 : vector<8x128xf32>
    %cst_40 = arith.constant 5.000000e-01 : f32
    %153 = vector.broadcast %cst_40 : f32 to vector<8x128xf32>
    %154 = arith.mulf %153, %152 : vector<8x128xf32>
    %cst_41 = arith.constant 5.000000e-01 : f32
    %155 = vector.broadcast %cst_41 : f32 to vector<8x128xf32>
    %156 = arith.addf %155, %154 : vector<8x128xf32>
    %157 = vector.broadcast %149 : f32 to vector<8x128xf32>
    %158 = arith.mulf %157, %156 : vector<8x128xf32>
    %159 = arith.addf %137, %158 : vector<8x128xf32>
    %c7 = arith.constant 7 : index
    %160 = memref.load %arg2[%c7] : memref<12xf32, #tpu.memory_space<smem>>
    %161 = vector.extract_strided_slice %4 {offsets = [2, 0, 0], sizes = [1, 8, 128], strides = [1, 1, 1]} : vector<4x8x128xf32> to vector<1x8x128xf32>
    %162 = vector.shape_cast %161 : vector<1x8x128xf32> to vector<8x128xf32>
    %163 = vector.extract_strided_slice %4 {offsets = [1, 0, 0], sizes = [1, 8, 128], strides = [1, 1, 1]} : vector<4x8x128xf32> to vector<1x8x128xf32>
    %164 = vector.shape_cast %163 : vector<1x8x128xf32> to vector<8x128xf32>
    %165 = arith.subf %162, %164 : vector<8x128xf32>
    %c7_42 = arith.constant 7 : index
    %166 = memref.load %arg3[%c7_42] : memref<12xf32, #tpu.memory_space<smem>>
    %167 = vector.broadcast %166 : f32 to vector<8x128xf32>
    %168 = arith.subf %165, %167 : vector<8x128xf32>
    %169 = vector.broadcast %160 : f32 to vector<8x128xf32>
    %170 = arith.mulf %169, %168 : vector<8x128xf32>
    %c7_43 = arith.constant 7 : index
    %171 = memref.load %arg4[%c7_43] : memref<12xf32, #tpu.memory_space<smem>>
    %cst_44 = arith.constant 5.000000e-01 : f32
    %172 = vector.broadcast %cst_44 : f32 to vector<8x128xf32>
    %173 = arith.mulf %172, %170 : vector<8x128xf32>
    %174 = math.tanh %173 : vector<8x128xf32>
    %cst_45 = arith.constant 5.000000e-01 : f32
    %175 = vector.broadcast %cst_45 : f32 to vector<8x128xf32>
    %176 = arith.mulf %175, %174 : vector<8x128xf32>
    %cst_46 = arith.constant 5.000000e-01 : f32
    %177 = vector.broadcast %cst_46 : f32 to vector<8x128xf32>
    %178 = arith.addf %177, %176 : vector<8x128xf32>
    %179 = vector.broadcast %171 : f32 to vector<8x128xf32>
    %180 = arith.mulf %179, %178 : vector<8x128xf32>
    %181 = arith.addf %159, %180 : vector<8x128xf32>
    %c8 = arith.constant 8 : index
    %182 = memref.load %arg2[%c8] : memref<12xf32, #tpu.memory_space<smem>>
    %183 = vector.extract_strided_slice %4 {offsets = [2, 0, 0], sizes = [1, 8, 128], strides = [1, 1, 1]} : vector<4x8x128xf32> to vector<1x8x128xf32>
    %184 = vector.shape_cast %183 : vector<1x8x128xf32> to vector<8x128xf32>
    %185 = vector.extract_strided_slice %4 {offsets = [3, 0, 0], sizes = [1, 8, 128], strides = [1, 1, 1]} : vector<4x8x128xf32> to vector<1x8x128xf32>
    %186 = vector.shape_cast %185 : vector<1x8x128xf32> to vector<8x128xf32>
    %187 = arith.subf %184, %186 : vector<8x128xf32>
    %c8_47 = arith.constant 8 : index
    %188 = memref.load %arg3[%c8_47] : memref<12xf32, #tpu.memory_space<smem>>
    %189 = vector.broadcast %188 : f32 to vector<8x128xf32>
    %190 = arith.subf %187, %189 : vector<8x128xf32>
    %191 = vector.broadcast %182 : f32 to vector<8x128xf32>
    %192 = arith.mulf %191, %190 : vector<8x128xf32>
    %c8_48 = arith.constant 8 : index
    %193 = memref.load %arg4[%c8_48] : memref<12xf32, #tpu.memory_space<smem>>
    %cst_49 = arith.constant 5.000000e-01 : f32
    %194 = vector.broadcast %cst_49 : f32 to vector<8x128xf32>
    %195 = arith.mulf %194, %192 : vector<8x128xf32>
    %196 = math.tanh %195 : vector<8x128xf32>
    %cst_50 = arith.constant 5.000000e-01 : f32
    %197 = vector.broadcast %cst_50 : f32 to vector<8x128xf32>
    %198 = arith.mulf %197, %196 : vector<8x128xf32>
    %cst_51 = arith.constant 5.000000e-01 : f32
    %199 = vector.broadcast %cst_51 : f32 to vector<8x128xf32>
    %200 = arith.addf %199, %198 : vector<8x128xf32>
    %201 = vector.broadcast %193 : f32 to vector<8x128xf32>
    %202 = arith.mulf %201, %200 : vector<8x128xf32>
    %203 = arith.addf %181, %202 : vector<8x128xf32>
    %c9 = arith.constant 9 : index
    %204 = memref.load %arg2[%c9] : memref<12xf32, #tpu.memory_space<smem>>
    %205 = vector.extract_strided_slice %4 {offsets = [3, 0, 0], sizes = [1, 8, 128], strides = [1, 1, 1]} : vector<4x8x128xf32> to vector<1x8x128xf32>
    %206 = vector.shape_cast %205 : vector<1x8x128xf32> to vector<8x128xf32>
    %207 = vector.extract_strided_slice %4 {offsets = [0, 0, 0], sizes = [1, 8, 128], strides = [1, 1, 1]} : vector<4x8x128xf32> to vector<1x8x128xf32>
    %208 = vector.shape_cast %207 : vector<1x8x128xf32> to vector<8x128xf32>
    %209 = arith.subf %206, %208 : vector<8x128xf32>
    %c9_52 = arith.constant 9 : index
    %210 = memref.load %arg3[%c9_52] : memref<12xf32, #tpu.memory_space<smem>>
    %211 = vector.broadcast %210 : f32 to vector<8x128xf32>
    %212 = arith.subf %209, %211 : vector<8x128xf32>
    %213 = vector.broadcast %204 : f32 to vector<8x128xf32>
    %214 = arith.mulf %213, %212 : vector<8x128xf32>
    %c9_53 = arith.constant 9 : index
    %215 = memref.load %arg4[%c9_53] : memref<12xf32, #tpu.memory_space<smem>>
    %cst_54 = arith.constant 5.000000e-01 : f32
    %216 = vector.broadcast %cst_54 : f32 to vector<8x128xf32>
    %217 = arith.mulf %216, %214 : vector<8x128xf32>
    %218 = math.tanh %217 : vector<8x128xf32>
    %cst_55 = arith.constant 5.000000e-01 : f32
    %219 = vector.broadcast %cst_55 : f32 to vector<8x128xf32>
    %220 = arith.mulf %219, %218 : vector<8x128xf32>
    %cst_56 = arith.constant 5.000000e-01 : f32
    %221 = vector.broadcast %cst_56 : f32 to vector<8x128xf32>
    %222 = arith.addf %221, %220 : vector<8x128xf32>
    %223 = vector.broadcast %215 : f32 to vector<8x128xf32>
    %224 = arith.mulf %223, %222 : vector<8x128xf32>
    %225 = arith.addf %203, %224 : vector<8x128xf32>
    %c10 = arith.constant 10 : index
    %226 = memref.load %arg2[%c10] : memref<12xf32, #tpu.memory_space<smem>>
    %227 = vector.extract_strided_slice %4 {offsets = [3, 0, 0], sizes = [1, 8, 128], strides = [1, 1, 1]} : vector<4x8x128xf32> to vector<1x8x128xf32>
    %228 = vector.shape_cast %227 : vector<1x8x128xf32> to vector<8x128xf32>
    %229 = vector.extract_strided_slice %4 {offsets = [1, 0, 0], sizes = [1, 8, 128], strides = [1, 1, 1]} : vector<4x8x128xf32> to vector<1x8x128xf32>
    %230 = vector.shape_cast %229 : vector<1x8x128xf32> to vector<8x128xf32>
    %231 = arith.subf %228, %230 : vector<8x128xf32>
    %c10_57 = arith.constant 10 : index
    %232 = memref.load %arg3[%c10_57] : memref<12xf32, #tpu.memory_space<smem>>
    %233 = vector.broadcast %232 : f32 to vector<8x128xf32>
    %234 = arith.subf %231, %233 : vector<8x128xf32>
    %235 = vector.broadcast %226 : f32 to vector<8x128xf32>
    %236 = arith.mulf %235, %234 : vector<8x128xf32>
    %c10_58 = arith.constant 10 : index
    %237 = memref.load %arg4[%c10_58] : memref<12xf32, #tpu.memory_space<smem>>
    %cst_59 = arith.constant 5.000000e-01 : f32
    %238 = vector.broadcast %cst_59 : f32 to vector<8x128xf32>
    %239 = arith.mulf %238, %236 : vector<8x128xf32>
    %240 = math.tanh %239 : vector<8x128xf32>
    %cst_60 = arith.constant 5.000000e-01 : f32
    %241 = vector.broadcast %cst_60 : f32 to vector<8x128xf32>
    %242 = arith.mulf %241, %240 : vector<8x128xf32>
    %cst_61 = arith.constant 5.000000e-01 : f32
    %243 = vector.broadcast %cst_61 : f32 to vector<8x128xf32>
    %244 = arith.addf %243, %242 : vector<8x128xf32>
    %245 = vector.broadcast %237 : f32 to vector<8x128xf32>
    %246 = arith.mulf %245, %244 : vector<8x128xf32>
    %247 = arith.addf %225, %246 : vector<8x128xf32>
    %c11 = arith.constant 11 : index
    %248 = memref.load %arg2[%c11] : memref<12xf32, #tpu.memory_space<smem>>
    %249 = vector.extract_strided_slice %4 {offsets = [3, 0, 0], sizes = [1, 8, 128], strides = [1, 1, 1]} : vector<4x8x128xf32> to vector<1x8x128xf32>
    %250 = vector.shape_cast %249 : vector<1x8x128xf32> to vector<8x128xf32>
    %251 = vector.extract_strided_slice %4 {offsets = [2, 0, 0], sizes = [1, 8, 128], strides = [1, 1, 1]} : vector<4x8x128xf32> to vector<1x8x128xf32>
    %252 = vector.shape_cast %251 : vector<1x8x128xf32> to vector<8x128xf32>
    %253 = arith.subf %250, %252 : vector<8x128xf32>
    %c11_62 = arith.constant 11 : index
    %254 = memref.load %arg3[%c11_62] : memref<12xf32, #tpu.memory_space<smem>>
    %255 = vector.broadcast %254 : f32 to vector<8x128xf32>
    %256 = arith.subf %253, %255 : vector<8x128xf32>
    %257 = vector.broadcast %248 : f32 to vector<8x128xf32>
    %258 = arith.mulf %257, %256 : vector<8x128xf32>
    %c11_63 = arith.constant 11 : index
    %259 = memref.load %arg4[%c11_63] : memref<12xf32, #tpu.memory_space<smem>>
    %cst_64 = arith.constant 5.000000e-01 : f32
    %260 = vector.broadcast %cst_64 : f32 to vector<8x128xf32>
    %261 = arith.mulf %260, %258 : vector<8x128xf32>
    %262 = math.tanh %261 : vector<8x128xf32>
    %cst_65 = arith.constant 5.000000e-01 : f32
    %263 = vector.broadcast %cst_65 : f32 to vector<8x128xf32>
    %264 = arith.mulf %263, %262 : vector<8x128xf32>
    %cst_66 = arith.constant 5.000000e-01 : f32
    %265 = vector.broadcast %cst_66 : f32 to vector<8x128xf32>
    %266 = arith.addf %265, %264 : vector<8x128xf32>
    %267 = vector.broadcast %259 : f32 to vector<8x128xf32>
    %268 = arith.mulf %267, %266 : vector<8x128xf32>
    %269 = arith.addf %247, %268 : vector<8x128xf32>
    %cst_67 = arith.constant 0.000000e+00 : f32
    %cst_68 = arith.constant 1.000000e+00 : f32
    %270 = vector.broadcast %cst_67 : f32 to vector<8x128xf32>
    %271 = arith.maximumf %270, %269 : vector<8x128xf32>
    %272 = vector.broadcast %cst_68 : f32 to vector<8x128xf32>
    %273 = arith.minimumf %272, %271 : vector<8x128xf32>
    %cst_69 = arith.constant 9.99999997E-7 : f32
    %274 = vector.broadcast %cst_69 : f32 to vector<8x128xf32>
    %275 = arith.addf %273, %274 : vector<8x128xf32>
    %276 = math.log %275 : vector<8x128xf32>
    %277 = vector.broadcast %2 : f32 to vector<8x128xf32>
    %278 = arith.mulf %277, %276 : vector<8x128xf32>
    %cst_70 = arith.constant 1.000000e+00 : f32
    %279 = vector.broadcast %cst_70 : f32 to vector<8x128xf32>
    %280 = arith.subf %279, %273 : vector<8x128xf32>
    %cst_71 = arith.constant 9.99999997E-7 : f32
    %281 = vector.broadcast %cst_71 : f32 to vector<8x128xf32>
    %282 = arith.addf %280, %281 : vector<8x128xf32>
    %283 = math.log %282 : vector<8x128xf32>
    %284 = vector.broadcast %3 : f32 to vector<8x128xf32>
    %285 = arith.mulf %284, %283 : vector<8x128xf32>
    %c0_72 = arith.constant 0 : index
    %286 = memref.load %arg5[%c0_72] : memref<4xf32, #tpu.memory_space<smem>>
    %287 = vector.extract_strided_slice %4 {offsets = [0, 0, 0], sizes = [1, 8, 128], strides = [1, 1, 1]} : vector<4x8x128xf32> to vector<1x8x128xf32>
    %288 = vector.shape_cast %287 : vector<1x8x128xf32> to vector<8x128xf32>
    %c0_73 = arith.constant 0 : index
    %289 = memref.load %arg6[%c0_73] : memref<4xf32, #tpu.memory_space<smem>>
    %290 = vector.broadcast %289 : f32 to vector<8x128xf32>
    %291 = arith.subf %288, %290 : vector<8x128xf32>
    %292 = vector.broadcast %286 : f32 to vector<8x128xf32>
    %293 = arith.mulf %292, %291 : vector<8x128xf32>
    %cst_74 = arith.constant 0.000000e+00 : f32
    %294 = vector.broadcast %cst_74 : f32 to vector<8x128xf32>
    %295 = arith.subf %294, %293 : vector<8x128xf32>
    %cst_75 = arith.constant 0.000000e+00 : f32
    %296 = vector.broadcast %cst_75 : f32 to vector<8x128xf32>
    %297 = arith.maximumf %295, %296 : vector<8x128xf32>
    %298 = math.absf %293 : vector<8x128xf32>
    %cst_76 = arith.constant 0.000000e+00 : f32
    %299 = vector.broadcast %cst_76 : f32 to vector<8x128xf32>
    %300 = arith.subf %299, %298 : vector<8x128xf32>
    %301 = math.exp %300 : vector<8x128xf32>
    %cst_77 = arith.constant 1.000000e+00 : f32
    %302 = vector.broadcast %cst_77 : f32 to vector<8x128xf32>
    %303 = arith.addf %302, %301 : vector<8x128xf32>
    %304 = math.log %303 : vector<8x128xf32>
    %305 = arith.addf %297, %304 : vector<8x128xf32>
    %c1_78 = arith.constant 1 : index
    %306 = memref.load %arg7[%c1_78] : memref<5xf32, #tpu.memory_space<smem>>
    %307 = vector.broadcast %306 : f32 to vector<8x128xf32>
    %308 = arith.mulf %307, %305 : vector<8x128xf32>
    %309 = arith.subf %278, %308 : vector<8x128xf32>
    %c1_79 = arith.constant 1 : index
    %310 = memref.load %arg8[%c1_79] : memref<5xf32, #tpu.memory_space<smem>>
    %311 = arith.addf %293, %305 : vector<8x128xf32>
    %312 = vector.broadcast %310 : f32 to vector<8x128xf32>
    %313 = arith.mulf %312, %311 : vector<8x128xf32>
    %314 = arith.subf %285, %313 : vector<8x128xf32>
    %c1_80 = arith.constant 1 : index
    %315 = memref.load %arg5[%c1_80] : memref<4xf32, #tpu.memory_space<smem>>
    %316 = vector.extract_strided_slice %4 {offsets = [1, 0, 0], sizes = [1, 8, 128], strides = [1, 1, 1]} : vector<4x8x128xf32> to vector<1x8x128xf32>
    %317 = vector.shape_cast %316 : vector<1x8x128xf32> to vector<8x128xf32>
    %c1_81 = arith.constant 1 : index
    %318 = memref.load %arg6[%c1_81] : memref<4xf32, #tpu.memory_space<smem>>
    %319 = vector.broadcast %318 : f32 to vector<8x128xf32>
    %320 = arith.subf %317, %319 : vector<8x128xf32>
    %321 = vector.broadcast %315 : f32 to vector<8x128xf32>
    %322 = arith.mulf %321, %320 : vector<8x128xf32>
    %cst_82 = arith.constant 0.000000e+00 : f32
    %323 = vector.broadcast %cst_82 : f32 to vector<8x128xf32>
    %324 = arith.subf %323, %322 : vector<8x128xf32>
    %cst_83 = arith.constant 0.000000e+00 : f32
    %325 = vector.broadcast %cst_83 : f32 to vector<8x128xf32>
    %326 = arith.maximumf %324, %325 : vector<8x128xf32>
    %327 = math.absf %322 : vector<8x128xf32>
    %cst_84 = arith.constant 0.000000e+00 : f32
    %328 = vector.broadcast %cst_84 : f32 to vector<8x128xf32>
    %329 = arith.subf %328, %327 : vector<8x128xf32>
    %330 = math.exp %329 : vector<8x128xf32>
    %cst_85 = arith.constant 1.000000e+00 : f32
    %331 = vector.broadcast %cst_85 : f32 to vector<8x128xf32>
    %332 = arith.addf %331, %330 : vector<8x128xf32>
    %333 = math.log %332 : vector<8x128xf32>
    %334 = arith.addf %326, %333 : vector<8x128xf32>
    %c2_86 = arith.constant 2 : index
    %335 = memref.load %arg7[%c2_86] : memref<5xf32, #tpu.memory_space<smem>>
    %336 = vector.broadcast %335 : f32 to vector<8x128xf32>
    %337 = arith.mulf %336, %334 : vector<8x128xf32>
    %338 = arith.subf %309, %337 : vector<8x128xf32>
    %c2_87 = arith.constant 2 : index
    %339 = memref.load %arg8[%c2_87] : memref<5xf32, #tpu.memory_space<smem>>
    %340 = arith.addf %322, %334 : vector<8x128xf32>
    %341 = vector.broadcast %339 : f32 to vector<8x128xf32>
    %342 = arith.mulf %341, %340 : vector<8x128xf32>
    %343 = arith.subf %314, %342 : vector<8x128xf32>
    %c2_88 = arith.constant 2 : index
    %344 = memref.load %arg5[%c2_88] : memref<4xf32, #tpu.memory_space<smem>>
    %345 = vector.extract_strided_slice %4 {offsets = [2, 0, 0], sizes = [1, 8, 128], strides = [1, 1, 1]} : vector<4x8x128xf32> to vector<1x8x128xf32>
    %346 = vector.shape_cast %345 : vector<1x8x128xf32> to vector<8x128xf32>
    %c2_89 = arith.constant 2 : index
    %347 = memref.load %arg6[%c2_89] : memref<4xf32, #tpu.memory_space<smem>>
    %348 = vector.broadcast %347 : f32 to vector<8x128xf32>
    %349 = arith.subf %346, %348 : vector<8x128xf32>
    %350 = vector.broadcast %344 : f32 to vector<8x128xf32>
    %351 = arith.mulf %350, %349 : vector<8x128xf32>
    %cst_90 = arith.constant 0.000000e+00 : f32
    %352 = vector.broadcast %cst_90 : f32 to vector<8x128xf32>
    %353 = arith.subf %352, %351 : vector<8x128xf32>
    %cst_91 = arith.constant 0.000000e+00 : f32
    %354 = vector.broadcast %cst_91 : f32 to vector<8x128xf32>
    %355 = arith.maximumf %353, %354 : vector<8x128xf32>
    %356 = math.absf %351 : vector<8x128xf32>
    %cst_92 = arith.constant 0.000000e+00 : f32
    %357 = vector.broadcast %cst_92 : f32 to vector<8x128xf32>
    %358 = arith.subf %357, %356 : vector<8x128xf32>
    %359 = math.exp %358 : vector<8x128xf32>
    %cst_93 = arith.constant 1.000000e+00 : f32
    %360 = vector.broadcast %cst_93 : f32 to vector<8x128xf32>
    %361 = arith.addf %360, %359 : vector<8x128xf32>
    %362 = math.log %361 : vector<8x128xf32>
    %363 = arith.addf %355, %362 : vector<8x128xf32>
    %c3_94 = arith.constant 3 : index
    %364 = memref.load %arg7[%c3_94] : memref<5xf32, #tpu.memory_space<smem>>
    %365 = vector.broadcast %364 : f32 to vector<8x128xf32>
    %366 = arith.mulf %365, %363 : vector<8x128xf32>
    %367 = arith.subf %338, %366 : vector<8x128xf32>
    %c3_95 = arith.constant 3 : index
    %368 = memref.load %arg8[%c3_95] : memref<5xf32, #tpu.memory_space<smem>>
    %369 = arith.addf %351, %363 : vector<8x128xf32>
    %370 = vector.broadcast %368 : f32 to vector<8x128xf32>
    %371 = arith.mulf %370, %369 : vector<8x128xf32>
    %372 = arith.subf %343, %371 : vector<8x128xf32>
    %c3_96 = arith.constant 3 : index
    %373 = memref.load %arg5[%c3_96] : memref<4xf32, #tpu.memory_space<smem>>
    %374 = vector.extract_strided_slice %4 {offsets = [3, 0, 0], sizes = [1, 8, 128], strides = [1, 1, 1]} : vector<4x8x128xf32> to vector<1x8x128xf32>
    %375 = vector.shape_cast %374 : vector<1x8x128xf32> to vector<8x128xf32>
    %c3_97 = arith.constant 3 : index
    %376 = memref.load %arg6[%c3_97] : memref<4xf32, #tpu.memory_space<smem>>
    %377 = vector.broadcast %376 : f32 to vector<8x128xf32>
    %378 = arith.subf %375, %377 : vector<8x128xf32>
    %379 = vector.broadcast %373 : f32 to vector<8x128xf32>
    %380 = arith.mulf %379, %378 : vector<8x128xf32>
    %cst_98 = arith.constant 0.000000e+00 : f32
    %381 = vector.broadcast %cst_98 : f32 to vector<8x128xf32>
    %382 = arith.subf %381, %380 : vector<8x128xf32>
    %cst_99 = arith.constant 0.000000e+00 : f32
    %383 = vector.broadcast %cst_99 : f32 to vector<8x128xf32>
    %384 = arith.maximumf %382, %383 : vector<8x128xf32>
    %385 = math.absf %380 : vector<8x128xf32>
    %cst_100 = arith.constant 0.000000e+00 : f32
    %386 = vector.broadcast %cst_100 : f32 to vector<8x128xf32>
    %387 = arith.subf %386, %385 : vector<8x128xf32>
    %388 = math.exp %387 : vector<8x128xf32>
    %cst_101 = arith.constant 1.000000e+00 : f32
    %389 = vector.broadcast %cst_101 : f32 to vector<8x128xf32>
    %390 = arith.addf %389, %388 : vector<8x128xf32>
    %391 = math.log %390 : vector<8x128xf32>
    %392 = arith.addf %384, %391 : vector<8x128xf32>
    %c4_102 = arith.constant 4 : index
    %393 = memref.load %arg7[%c4_102] : memref<5xf32, #tpu.memory_space<smem>>
    %394 = vector.broadcast %393 : f32 to vector<8x128xf32>
    %395 = arith.mulf %394, %392 : vector<8x128xf32>
    %396 = arith.subf %367, %395 : vector<8x128xf32>
    %c4_103 = arith.constant 4 : index
    %397 = memref.load %arg8[%c4_103] : memref<5xf32, #tpu.memory_space<smem>>
    %398 = arith.addf %380, %392 : vector<8x128xf32>
    %399 = vector.broadcast %397 : f32 to vector<8x128xf32>
    %400 = arith.mulf %399, %398 : vector<8x128xf32>
    %401 = arith.subf %372, %400 : vector<8x128xf32>
    %402 = math.exp %396 : vector<8x128xf32>
    %403 = math.exp %401 : vector<8x128xf32>
    %cst_104 = arith.constant 1.000000e+00 : f32
    %404 = vector.broadcast %cst_104 : f32 to vector<8x128xf32>
    %405 = arith.subf %404, %403 : vector<8x128xf32>
    %406 = vector.broadcast %0 : f32 to vector<8x128xf32>
    %407 = arith.mulf %406, %402 : vector<8x128xf32>
    %cst_105 = arith.constant 1.000000e+00 : f32
    %408 = arith.subf %cst_105, %0 : f32
    %409 = vector.broadcast %408 : f32 to vector<8x128xf32>
    %410 = arith.mulf %409, %405 : vector<8x128xf32>
    %411 = arith.addf %407, %410 : vector<8x128xf32>
    %412 = vector.broadcast %1 : f32 to vector<8x128xf32>
    %413 = arith.addf %411, %412 : vector<8x128xf32>
    %414 = math.exp %413 : vector<8x128xf32>
    %c0_106 = arith.constant 0 : index
    %c0_107 = arith.constant 0 : index
    %415 = vector.load %arg11[%c0_106, %c0_107] : memref<8x128xf32, #tpu.memory_space<vmem>>, vector<8x128xf32>
    tpu.vector_store %arg11[%c0_106, %c0_107], %414 {strides = array<i32>} : memref<8x128xf32, #tpu.memory_space<vmem>>, vector<8x128xf32>,
    return
  }
  func.func @transform_0(%arg0: i32) -> (i32, i32, i32) {
    %c0_i32 = arith.constant 0 : i32
    %c0_i32_0 = arith.constant 0 : i32
    %c0_i32_1 = arith.constant 0 : i32
    return %c0_i32, %arg0, %c0_i32_0 : i32, i32, i32
  }
  func.func @transform_1(%arg0: i32) -> i32 {
    %c0_i32 = arith.constant 0 : i32
    %c0_i32_0 = arith.constant 0 : i32
    return %c0_i32 : i32
  }
  func.func @transform_2(%arg0: i32) -> i32 {
    %c0_i32 = arith.constant 0 : i32
    %c0_i32_0 = arith.constant 0 : i32
    return %c0_i32 : i32
  }
  func.func @transform_3(%arg0: i32) -> i32 {
    %c0_i32 = arith.constant 0 : i32
    %c0_i32_0 = arith.constant 0 : i32
    return %c0_i32 : i32
  }
  func.func @transform_4(%arg0: i32) -> i32 {
    %c0_i32 = arith.constant 0 : i32
    %c0_i32_0 = arith.constant 0 : i32
    return %c0_i32 : i32
  }
  func.func @transform_5(%arg0: i32) -> i32 {
    %c0_i32 = arith.constant 0 : i32
    %c0_i32_0 = arith.constant 0 : i32
    return %c0_i32 : i32
  }
  func.func @transform_6(%arg0: i32) -> i32 {
    %c0_i32 = arith.constant 0 : i32
    %c0_i32_0 = arith.constant 0 : i32
    return %c0_i32 : i32
  }
  func.func @transform_7(%arg0: i32) -> i32 {
    %c0_i32 = arith.constant 0 : i32
    %c0_i32_0 = arith.constant 0 : i32
    return %c0_i32 : i32
  }
  func.func @transform_8(%arg0: i32) -> i32 {
    %c0_i32 = arith.constant 0 : i32
    %c0_i32_0 = arith.constant 0 : i32
    return %c0_i32 : i32
  }
  func.func @transform_9(%arg0: i32) -> i32 {
    %c0_i32 = arith.constant 0 : i32
    %c0_i32_0 = arith.constant 0 : i32
    return %c0_i32 : i32
  }
  func.func @transform_10(%arg0: i32) -> (i32, i32) {
    %c0_i32 = arith.constant 0 : i32
    %c0_i32_0 = arith.constant 0 : i32
    return %arg0, %c0_i32 : i32, i32
  }
}

</mosaic_0001>

<llo_original>
// kernel: tpu_custom_call.1
$region0: #{tpu_custom_call.1}
  #allocation0 [shape = 'u32[]', space=smem, size = 0x4, offset = 0x4, fixed_abs, tag = 'smem constant byte address 0x4 - core index']
  #allocation1 [shape = 'u32[72,128]{1,0:T(1,128)}', space=vmem, size = 0x9000, scoped, tag = 'internal scratch']
  #allocation2 [shape = 'f32[1]{0:T(128)S(6)}', space=smem, size = 0x200, scoped, tag = 'scoped memory for tpu_custom_call.1']
  #allocation3 [shape = 'f32[1]{0:T(128)S(6)}', space=smem, size = 0x200, scoped, tag = 'scoped memory for tpu_custom_call.1']
  %s0 = inlined_call_operand.hbm [shape: f32[4,8,128], index: 0, kind: input, shape index: {}]
  %s1 = inlined_call_operand.vmem [shape: f32[12], index: 1, kind: input, shape index: {}]
  %s2 = inlined_call_operand.vmem [shape: f32[12], index: 2, kind: input, shape index: {}]
  %s3 = inlined_call_operand.vmem [shape: f32[12], index: 3, kind: input, shape index: {}]
  %s4 = inlined_call_operand.vmem [shape: f32[4], index: 4, kind: input, shape index: {}]
  %s5 = inlined_call_operand.vmem [shape: f32[4], index: 5, kind: input, shape index: {}]
  %s6 = inlined_call_operand.vmem [shape: f32[5], index: 6, kind: input, shape index: {}]
  %s7 = inlined_call_operand.vmem [shape: f32[5], index: 7, kind: input, shape index: {}]
  %s8 = inlined_call_operand.<no memory space> [shape: f32[1], index: 8, kind: input, shape index: {}]
  %s9 = inlined_call_operand.<no memory space> [shape: f32[1], index: 9, kind: input, shape index: {}]
  %s10 = inlined_call_operand.hbm [shape: f32[8,128], index: 10, kind: output, shape index: {}]
  %s11 = sld [smem:[#allocation0]]
  $region82: #{tpu_custom_call.1} parent=0
    _
  %s13 = ssub.s32 1, %s11
  %s14 = scalar_select 0, %s13, %s11
  %15 = sst [smem:[#allocation2]] %s8
  %16 = sst [smem:[#allocation3]] %s9
  $region1: #{tpu_custom_call.1} parent=0
    #allocation4 [shape = 'u8[16384]{0}', space=vmem, size = 0x4000, scoped, tag = 'input window, operand 0, single buffered']
    #allocation5 [shape = 's32[1]{0}', space=sflag, size = 0x4, scoped, tag = 'scoped memory for tpu_custom_call.1']
    #allocation6 [shape = 's32[1]{0}', space=sflag, size = 0x4, scoped, tag = 'scoped memory for tpu_custom_call.1']
    #allocation7 [shape = 's32[1]{0}', space=sflag, size = 0x4, scoped, tag = 'scoped memory for tpu_custom_call.1']
    #allocation8 [shape = 'u8[512]{0}', space=smem, size = 0x200, scoped, tag = 'input window, operand 1, single buffered']
    #allocation9 [shape = 'u8[512]{0}', space=smem, size = 0x200, scoped, tag = 'input window, operand 2, single buffered']
    #allocation10 [shape = 's32[1]{0}', space=sflag, size = 0x4, scoped, tag = 'scoped memory for tpu_custom_call.1']
    #allocation11 [shape = 'u8[512]{0}', space=smem, size = 0x200, scoped, tag = 'input window, operand 3, single buffered']
    #allocation12 [shape = 'u8[512]{0}', space=smem, size = 0x200, scoped, tag = 'input window, operand 4, single buffered']
    #allocation13 [shape = 's32[1]{0}', space=sflag, size = 0x4, scoped, tag = 'scoped memory for tpu_custom_call.1']
    #allocation14 [shape = 'u8[512]{0}', space=smem, size = 0x200, scoped, tag = 'input window, operand 5, single buffered']
    #allocation15 [shape = 'u8[512]{0}', space=smem, size = 0x200, scoped, tag = 'input window, operand 6, single buffered']
    #allocation16 [shape = 's32[1]{0}', space=sflag, size = 0x4, scoped, tag = 'scoped memory for tpu_custom_call.1']
    #allocation17 [shape = 'u8[512]{0}', space=smem, size = 0x200, scoped, tag = 'input window, operand 7, single buffered']
    #allocation18 [shape = 'u8[4096]{0}', space=vmem, size = 0x1000, scoped, tag = 'output window, operand 0, single buffered']
    %17 = vsyncpa [#allocation5], 0
    %18 = vsyncpa [#allocation7], 0
    %19 = vsyncpa [#allocation10], 0
    %20 = vsyncpa [#allocation13], 0
    %21 = vsyncpa [#allocation16], 0
    %22 = vsyncpa [#allocation6], 0
    // Predicated region
    $region2: #{tpu_custom_call.1} parent=1 // pred_check
      _
    $region3: #{tpu_custom_call.1} parent=1 // pred_check_branch
      %24 = sbr.rel (0) target = $region5
    $region4: #{tpu_custom_call.1} parent=1 // pred_region
      %26 = vsyncadd [#allocation5], 0
      %s27 = sshll.u32 %s0, 4
      %s28 = int_to_ptr.hbm [resolvable:$true] %s27
      %s29 = sshll.u32 [#allocation4], 4
      %s30 = int_to_ptr.vmem [resolvable:$true] %s29
      %35 = dma.hbm_to_vmem [thread:$0]  %s28, 512, %s30, [#allocation5], 128, 128, 8
    $region5: #{tpu_custom_call.1} parent=1 // pred_fallthru
      _
    // Predicated region
    $region6: #{tpu_custom_call.1} parent=1 // pred_check
      _
    $region7: #{tpu_custom_call.1} parent=1 // pred_check_branch
      %37 = sbr.rel (0) target = $region9
    $region8: #{tpu_custom_call.1} parent=1 // pred_region
      %39 = vsyncadd [#allocation7], 0
      %s41 = sshll.u32 %s1, 4
      %s42 = int_to_ptr.vmem [resolvable:$true] %s41
      %44 = dma.vmem_to_smem %s42, 16, [#allocation8], [#allocation7]
    $region9: #{tpu_custom_call.1} parent=1 // pred_fallthru
      _
    // Predicated region
    $region10: #{tpu_custom_call.1} parent=1 // pred_check
      _
    $region11: #{tpu_custom_call.1} parent=1 // pred_check_branch
      %46 = sbr.rel (0) target = $region13
    $region12: #{tpu_custom_call.1} parent=1 // pred_region
      %48 = vsyncadd [#allocation10], 0
      %s50 = sshll.u32 %s2, 4
      %s51 = int_to_ptr.vmem [resolvable:$true] %s50
      %53 = dma.vmem_to_smem %s51, 16, [#allocation9], [#allocation10]
    $region13: #{tpu_custom_call.1} parent=1 // pred_fallthru
      _
    // Predicated region
    $region14: #{tpu_custom_call.1} parent=1 // pred_check
      _
    $region15: #{tpu_custom_call.1} parent=1 // pred_check_branch
      %55 = sbr.rel (0) target = $region17
    $region16: #{tpu_custom_call.1} parent=1 // pred_region
      %57 = vsyncadd [#allocation10], 0
      %s59 = sshll.u32 %s3, 4
      %s60 = int_to_ptr.vmem [resolvable:$true] %s59
      %62 = dma.vmem_to_smem %s60, 16, [#allocation11], [#allocation10]
    $region17: #{tpu_custom_call.1} parent=1 // pred_fallthru
      _
    // Predicated region
    $region18: #{tpu_custom_call.1} parent=1 // pred_check
      _
    $region19: #{tpu_custom_call.1} parent=1 // pred_check_branch
      %64 = sbr.rel (0) target = $region21
    $region20: #{tpu_custom_call.1} parent=1 // pred_region
      %66 = vsyncadd [#allocation13], 0
      %s68 = sshll.u32 %s4, 4
      %s69 = int_to_ptr.vmem [resolvable:$true] %s68
      %71 = dma.vmem_to_smem %s69, 16, [#allocation12], [#allocation13]
    $region21: #{tpu_custom_call.1} parent=1 // pred_fallthru
      _
    // Predicated region
    $region22: #{tpu_custom_call.1} parent=1 // pred_check
      _
    $region23: #{tpu_custom_call.1} parent=1 // pred_check_branch
      %73 = sbr.rel (0) target = $region25
    $region24: #{tpu_custom_call.1} parent=1 // pred_region
      %75 = vsyncadd [#allocation13], 0
      %s77 = sshll.u32 %s5, 4
      %s78 = int_to_ptr.vmem [resolvable:$true] %s77
      %80 = dma.vmem_to_smem %s78, 16, [#allocation14], [#allocation13]
    $region25: #{tpu_custom_call.1} parent=1 // pred_fallthru
      _
    // Predicated region
    $region26: #{tpu_custom_call.1} parent=1 // pred_check
      _
    $region27: #{tpu_custom_call.1} parent=1 // pred_check_branch
      %82 = sbr.rel (0) target = $region29
    $region28: #{tpu_custom_call.1} parent=1 // pred_region
      %84 = vsyncadd [#allocation16], 0
      %s86 = sshll.u32 %s6, 4
      %s87 = int_to_ptr.vmem [resolvable:$true] %s86
      %89 = dma.vmem_to_smem %s87, 16, [#allocation15], [#allocation16]
    $region29: #{tpu_custom_call.1} parent=1 // pred_fallthru
      _
    // Predicated region
    $region30: #{tpu_custom_call.1} parent=1 // pred_check
      _
    $region31: #{tpu_custom_call.1} parent=1 // pred_check_branch
      %91 = sbr.rel (0) target = $region33
    $region32: #{tpu_custom_call.1} parent=1 // pred_region
      %93 = vsyncadd [#allocation16], 0
      %s95 = sshll.u32 %s7, 4
      %s96 = int_to_ptr.vmem [resolvable:$true] %s95
      %98 = dma.vmem_to_smem %s96, 16, [#allocation17], [#allocation16]
    $region33: #{tpu_custom_call.1} parent=1 // pred_fallthru
      _
    // Predicated region
    $region34: #{tpu_custom_call.1} parent=1 // pred_check
      _
    $region35: #{tpu_custom_call.1} parent=1 // pred_check_branch
      %100 = sbr.rel (0) target = $region37
    $region36: #{tpu_custom_call.1} parent=1 // pred_region
      _
    $region37: #{tpu_custom_call.1} parent=1 // pred_fallthru
      _
    // Predicated region
    $region38: #{tpu_custom_call.1} parent=1 // pred_check
      _
    $region39: #{tpu_custom_call.1} parent=1 // pred_check_branch
      %102 = sbr.rel (0) target = $region41
    $region40: #{tpu_custom_call.1} parent=1 // pred_region
      _
    $region41: #{tpu_custom_call.1} parent=1 // pred_fallthru
      _
    // Predicated region
    $region42: #{tpu_custom_call.1} parent=1 // pred_check
      _
    $region43: #{tpu_custom_call.1} parent=1 // pred_check_branch
      %104 = sbr.rel (0) target = $region45
    $region44: #{tpu_custom_call.1} parent=1 // pred_region
      %106 = dma.done [#allocation5], 512
    $region45: #{tpu_custom_call.1} parent=1 // pred_fallthru
      _
    // Predicated region
    $region46: #{tpu_custom_call.1} parent=1 // pred_check
      _
    $region47: #{tpu_custom_call.1} parent=1 // pred_check_branch
      %108 = sbr.rel (0) target = $region49
    $region48: #{tpu_custom_call.1} parent=1 // pred_region
      %110 = dma.done [#allocation7], 16
    $region49: #{tpu_custom_call.1} parent=1 // pred_fallthru
      _
    // Predicated region
    $region50: #{tpu_custom_call.1} parent=1 // pred_check
      _
    $region51: #{tpu_custom_call.1} parent=1 // pred_check_branch
      %112 = sbr.rel (0) target = $region53
    $region52: #{tpu_custom_call.1} parent=1 // pred_region
      %114 = dma.done [#allocation10], 16
    $region53: #{tpu_custom_call.1} parent=1 // pred_fallthru
      _
    // Predicated region
    $region54: #{tpu_custom_call.1} parent=1 // pred_check
      _
    $region55: #{tpu_custom_call.1} parent=1 // pred_check_branch
      %116 = sbr.rel (0) target = $region57
    $region56: #{tpu_custom_call.1} parent=1 // pred_region
      %118 = dma.done [#allocation10], 16
    $region57: #{tpu_custom_call.1} parent=1 // pred_fallthru
      _
    // Predicated region
    $region58: #{tpu_custom_call.1} parent=1 // pred_check
      _
    $region59: #{tpu_custom_call.1} parent=1 // pred_check_branch
      %120 = sbr.rel (0) target = $region61
    $region60: #{tpu_custom_call.1} parent=1 // pred_region
      %122 = dma.done [#allocation13], 16
    $region61: #{tpu_custom_call.1} parent=1 // pred_fallthru
      _
    // Predicated region
    $region62: #{tpu_custom_call.1} parent=1 // pred_check
      _
    $region63: #{tpu_custom_call.1} parent=1 // pred_check_branch
      %124 = sbr.rel (0) target = $region65
    $region64: #{tpu_custom_call.1} parent=1 // pred_region
      %126 = dma.done [#allocation13], 16
    $region65: #{tpu_custom_call.1} parent=1 // pred_fallthru
      _
    // Predicated region
    $region66: #{tpu_custom_call.1} parent=1 // pred_check
      _
    $region67: #{tpu_custom_call.1} parent=1 // pred_check_branch
      %128 = sbr.rel (0) target = $region69
    $region68: #{tpu_custom_call.1} parent=1 // pred_region
      %130 = dma.done [#allocation16], 16
    $region69: #{tpu_custom_call.1} parent=1 // pred_fallthru
      _
    // Predicated region
    $region70: #{tpu_custom_call.1} parent=1 // pred_check
      _
    $region71: #{tpu_custom_call.1} parent=1 // pred_check_branch
      %132 = sbr.rel (0) target = $region73
    $region72: #{tpu_custom_call.1} parent=1 // pred_region
      %134 = dma.done [#allocation16], 16
    $region73: #{tpu_custom_call.1} parent=1 // pred_fallthru
      _
    %135 = sfence
    %s136 = sld [smem:[#allocation2]]
    %s137 = sld [smem:[#allocation3]]
    %s138 = sld [smem:[#allocation15]]
    %s139 = sld [smem:[#allocation17]]
    %v140 = vld [vmem:[#allocation4] sm:$0xff]
    %v141 = vld [vmem:[#allocation4 + $0x8] sm:$0xff]
    %v142 = vld [vmem:[#allocation4 + $0x10] sm:$0xff]
    %v143 = vld [vmem:[#allocation4 + $0x18] sm:$0xff]
    %s144 = sld [smem:[#allocation8]]
    %v145 = vsub.f32 %v140, %v141
    %s146 = sld [smem:[#allocation9]]
    %v147 = vstv %s146
    %v148 = vsub.f32 %v145, %v147
    %v149 = vstv %s144
    %v150 = vmul.f32 %v149, %v148
    %s151 = sld [smem:[#allocation11]]
    %v152 = vmul.f32 %v150, 0.5
    %v153 = vtanh.pop %v152
    %v154 = vmul.f32 %v153, 0.5
    %v155 = vadd.f32 %v154, 0.5
    %v156 = vstv %s151
    %v157 = vmul.f32 %v156, %v155
    %v158 = vadd.f32 %v157, 0.0
    %s159 = sld [smem:[#allocation8 + $0x1]]
    %v160 = vsub.f32 %v140, %v142
    %s161 = sld [smem:[#allocation9 + $0x1]]
    %v162 = vstv %s161
    %v163 = vsub.f32 %v160, %v162
    %v164 = vstv %s159
    %v165 = vmul.f32 %v164, %v163
    %s166 = sld [smem:[#allocation11 + $0x1]]
    %v167 = vmul.f32 %v165, 0.5
    %v168 = vtanh.pop %v167
    %v169 = vmul.f32 %v168, 0.5
    %v170 = vadd.f32 %v169, 0.5
    %v171 = vstv %s166
    %v172 = vmul.f32 %v171, %v170
    %v173 = vadd.f32 %v158, %v172
    %s174 = sld [smem:[#allocation8 + $0x2]]
    %v175 = vsub.f32 %v140, %v143
    %s176 = sld [smem:[#allocation9 + $0x2]]
    %v177 = vstv %s176
    %v178 = vsub.f32 %v175, %v177
    %v179 = vstv %s174
    %v180 = vmul.f32 %v179, %v178
    %s181 = sld [smem:[#allocation11 + $0x2]]
    %v182 = vmul.f32 %v180, 0.5
    %v183 = vtanh.pop %v182
    %v184 = vmul.f32 %v183, 0.5
    %v185 = vadd.f32 %v184, 0.5
    %v186 = vstv %s181
    %v187 = vmul.f32 %v186, %v185
    %v188 = vadd.f32 %v173, %v187
    %s189 = sld [smem:[#allocation8 + $0x3]]
    %v190 = vsub.f32 %v141, %v140
    %s191 = sld [smem:[#allocation9 + $0x3]]
    %v192 = vstv %s191
    %v193 = vsub.f32 %v190, %v192
    %v194 = vstv %s189
    %v195 = vmul.f32 %v194, %v193
    %s196 = sld [smem:[#allocation11 + $0x3]]
    %v197 = vmul.f32 %v195, 0.5
    %v198 = vtanh.pop %v197
    %v199 = vmul.f32 %v198, 0.5
    %v200 = vadd.f32 %v199, 0.5
    %v201 = vstv %s196
    %v202 = vmul.f32 %v201, %v200
    %v203 = vadd.f32 %v188, %v202
    %s204 = sld [smem:[#allocation8 + $0x4]]
    %v205 = vsub.f32 %v141, %v142
    %s206 = sld [smem:[#allocation9 + $0x4]]
    %v207 = vstv %s206
    %v208 = vsub.f32 %v205, %v207
    %v209 = vstv %s204
    %v210 = vmul.f32 %v209, %v208
    %s211 = sld [smem:[#allocation11 + $0x4]]
    %v212 = vmul.f32 %v210, 0.5
    %v213 = vtanh.pop %v212
    %v214 = vmul.f32 %v213, 0.5
    %v215 = vadd.f32 %v214, 0.5
    %v216 = vstv %s211
    %v217 = vmul.f32 %v216, %v215
    %v218 = vadd.f32 %v203, %v217
    %s219 = sld [smem:[#allocation8 + $0x5]]
    %v220 = vsub.f32 %v141, %v143
    %s221 = sld [smem:[#allocation9 + $0x5]]
    %v222 = vstv %s221
    %v223 = vsub.f32 %v220, %v222
    %v224 = vstv %s219
    %v225 = vmul.f32 %v224, %v223
    %s226 = sld [smem:[#allocation11 + $0x5]]
    %v227 = vmul.f32 %v225, 0.5
    %v228 = vtanh.pop %v227
    %v229 = vmul.f32 %v228, 0.5
    %v230 = vadd.f32 %v229, 0.5
    %v231 = vstv %s226
    %v232 = vmul.f32 %v231, %v230
    %v233 = vadd.f32 %v218, %v232
    %s234 = sld [smem:[#allocation8 + $0x6]]
    %v235 = vsub.f32 %v142, %v140
    %s236 = sld [smem:[#allocation9 + $0x6]]
    %v237 = vstv %s236
    %v238 = vsub.f32 %v235, %v237
    %v239 = vstv %s234
    %v240 = vmul.f32 %v239, %v238
    %s241 = sld [smem:[#allocation11 + $0x6]]
    %v242 = vmul.f32 %v240, 0.5
    %v243 = vtanh.pop %v242
    %v244 = vmul.f32 %v243, 0.5
    %v245 = vadd.f32 %v244, 0.5
    %v246 = vstv %s241
    %v247 = vmul.f32 %v246, %v245
    %v248 = vadd.f32 %v233, %v247
    %s249 = sld [smem:[#allocation8 + $0x7]]
    %v250 = vsub.f32 %v142, %v141
    %s251 = sld [smem:[#allocation9 + $0x7]]
    %v252 = vstv %s251
    %v253 = vsub.f32 %v250, %v252
    %v254 = vstv %s249
    %v255 = vmul.f32 %v254, %v253
    %s256 = sld [smem:[#allocation11 + $0x7]]
    %v257 = vmul.f32 %v255, 0.5
    %v258 = vtanh.pop %v257
    %v259 = vmul.f32 %v258, 0.5
    %v260 = vadd.f32 %v259, 0.5
    %v261 = vstv %s256
    %v262 = vmul.f32 %v261, %v260
    %v263 = vadd.f32 %v248, %v262
    %s264 = sld [smem:[#allocation8 + $0x8]]
    %v265 = vsub.f32 %v142, %v143
    %s266 = sld [smem:[#allocation9 + $0x8]]
    %v267 = vstv %s266
    %v268 = vsub.f32 %v265, %v267
    %v269 = vstv %s264
    %v270 = vmul.f32 %v269, %v268
    %s271 = sld [smem:[#allocation11 + $0x8]]
    %v272 = vmul.f32 %v270, 0.5
    %v273 = vtanh.pop %v272
    %v274 = vmul.f32 %v273, 0.5
    %v275 = vadd.f32 %v274, 0.5
    %v276 = vstv %s271
    %v277 = vmul.f32 %v276, %v275
    %v278 = vadd.f32 %v263, %v277
    %s279 = sld [smem:[#allocation8 + $0x9]]
    %v280 = vsub.f32 %v143, %v140
    %s281 = sld [smem:[#allocation9 + $0x9]]
    %v282 = vstv %s281
    %v283 = vsub.f32 %v280, %v282
    %v284 = vstv %s279
    %v285 = vmul.f32 %v284, %v283
    %s286 = sld [smem:[#allocation11 + $0x9]]
    %v287 = vmul.f32 %v285, 0.5
    %v288 = vtanh.pop %v287
    %v289 = vmul.f32 %v288, 0.5
    %v290 = vadd.f32 %v289, 0.5
    %v291 = vstv %s286
    %v292 = vmul.f32 %v291, %v290
    %v293 = vadd.f32 %v278, %v292
    %s294 = sld [smem:[#allocation8 + $0xa]]
    %v295 = vsub.f32 %v143, %v141
    %s296 = sld [smem:[#allocation9 + $0xa]]
    %v297 = vstv %s296
    %v298 = vsub.f32 %v295, %v297
    %v299 = vstv %s294
    %v300 = vmul.f32 %v299, %v298
    %s301 = sld [smem:[#allocation11 + $0xa]]
    %v302 = vmul.f32 %v300, 0.5
    %v303 = vtanh.pop %v302
    %v304 = vmul.f32 %v303, 0.5
    %v305 = vadd.f32 %v304, 0.5
    %v306 = vstv %s301
    %v307 = vmul.f32 %v306, %v305
    %v308 = vadd.f32 %v293, %v307
    %s309 = sld [smem:[#allocation8 + $0xb]]
    %v310 = vsub.f32 %v143, %v142
    %s311 = sld [smem:[#allocation9 + $0xb]]
    %v312 = vstv %s311
    %v313 = vsub.f32 %v310, %v312
    %v314 = vstv %s309
    %v315 = vmul.f32 %v314, %v313
    %s316 = sld [smem:[#allocation11 + $0xb]]
    %v317 = vmul.f32 %v315, 0.5
    %v318 = vtanh.pop %v317
    %v319 = vmul.f32 %v318, 0.5
    %v320 = vadd.f32 %v319, 0.5
    %v321 = vstv %s316
    %v322 = vmul.f32 %v321, %v320
    %v323 = vadd.f32 %v308, %v322
    %v324 = vmax.f32 %v323, 0.0
    %v325 = vmin.f32 %v324, 1.0
    %v326 = vadd.f32 %v325, 1e-06
    %v327 = vlog2.pop %v326
    %v328 = vmul.f32 %v327, 0.6931472
    %v329 = vstv %s138
    %v330 = vmul.f32 %v329, %v328
    %v331 = vsub.f32 1.0, %v325
    %v332 = vadd.f32 %v331, 1e-06
    %v333 = vlog2.pop %v332
    %v334 = vmul.f32 %v333, 0.6931472
    %v335 = vstv %s139
    %v336 = vmul.f32 %v335, %v334
    %s337 = sld [smem:[#allocation12]]
    %s338 = sld [smem:[#allocation14]]
    %v339 = vstv %s338
    %v340 = vsub.f32 %v140, %v339
    %v341 = vstv %s337
    %v342 = vmul.f32 %v341, %v340
    %v343 = vsub.f32 0.0, %v342
    %v344 = vmax.f32 %v343, 0.0
    %v345 = vand.u32 2147483647, %v342
    %v346 = vsub.f32 0.0, %v345
    %v347 = vmul.f32 %v346, 1.442695
    %v348 = vpow.pop %v347
    %v349 = vadd.f32 %v348, 1.0
    %v350 = vlog2.pop %v349
    %v351 = vmul.f32 %v350, 0.6931472
    %v352 = vadd.f32 %v344, %v351
    %s353 = sld [smem:[#allocation15 + $0x1]]
    %v354 = vstv %s353
    %v355 = vmul.f32 %v354, %v352
    %v356 = vsub.f32 %v330, %v355
    %s357 = sld [smem:[#allocation17 + $0x1]]
    %v358 = vadd.f32 %v342, %v352
    %v359 = vstv %s357
    %v360 = vmul.f32 %v359, %v358
    %v361 = vsub.f32 %v336, %v360
    %s362 = sld [smem:[#allocation12 + $0x1]]
    %s363 = sld [smem:[#allocation14 + $0x1]]
    %v364 = vstv %s363
    %v365 = vsub.f32 %v141, %v364
    %v366 = vstv %s362
    %v367 = vmul.f32 %v366, %v365
    %v368 = vsub.f32 0.0, %v367
    %v369 = vmax.f32 %v368, 0.0
    %v370 = vand.u32 2147483647, %v367
    %v371 = vsub.f32 0.0, %v370
    %v372 = vmul.f32 %v371, 1.442695
    %v373 = vpow.pop %v372
    %v374 = vadd.f32 %v373, 1.0
    %v375 = vlog2.pop %v374
    %v376 = vmul.f32 %v375, 0.6931472
    %v377 = vadd.f32 %v369, %v376
    %s378 = sld [smem:[#allocation15 + $0x2]]
    %v379 = vstv %s378
    %v380 = vmul.f32 %v379, %v377
    %v381 = vsub.f32 %v356, %v380
    %s382 = sld [smem:[#allocation17 + $0x2]]
    %v383 = vadd.f32 %v367, %v377
    %v384 = vstv %s382
    %v385 = vmul.f32 %v384, %v383
    %v386 = vsub.f32 %v361, %v385
    %s387 = sld [smem:[#allocation12 + $0x2]]
    %s388 = sld [smem:[#allocation14 + $0x2]]
    %v389 = vstv %s388
    %v390 = vsub.f32 %v142, %v389
    %v391 = vstv %s387
    %v392 = vmul.f32 %v391, %v390
    %v393 = vsub.f32 0.0, %v392
    %v394 = vmax.f32 %v393, 0.0
    %v395 = vand.u32 2147483647, %v392
    %v396 = vsub.f32 0.0, %v395
    %v397 = vmul.f32 %v396, 1.442695
    %v398 = vpow.pop %v397
    %v399 = vadd.f32 %v398, 1.0
    %v400 = vlog2.pop %v399
    %v401 = vmul.f32 %v400, 0.6931472
    %v402 = vadd.f32 %v394, %v401
    %s403 = sld [smem:[#allocation15 + $0x3]]
    %v404 = vstv %s403
    %v405 = vmul.f32 %v404, %v402
    %v406 = vsub.f32 %v381, %v405
    %s407 = sld [smem:[#allocation17 + $0x3]]
    %v408 = vadd.f32 %v392, %v402
    %v409 = vstv %s407
    %v410 = vmul.f32 %v409, %v408
    %v411 = vsub.f32 %v386, %v410
    %s412 = sld [smem:[#allocation12 + $0x3]]
    %s413 = sld [smem:[#allocation14 + $0x3]]
    %v414 = vstv %s413
    %v415 = vsub.f32 %v143, %v414
    %v416 = vstv %s412
    %v417 = vmul.f32 %v416, %v415
    %v418 = vsub.f32 0.0, %v417
    %v419 = vmax.f32 %v418, 0.0
    %v420 = vand.u32 2147483647, %v417
    %v421 = vsub.f32 0.0, %v420
    %v422 = vmul.f32 %v421, 1.442695
    %v423 = vpow.pop %v422
    %v424 = vadd.f32 %v423, 1.0
    %v425 = vlog2.pop %v424
    %v426 = vmul.f32 %v425, 0.6931472
    %v427 = vadd.f32 %v419, %v426
    %s428 = sld [smem:[#allocation15 + $0x4]]
    %v429 = vstv %s428
    %v430 = vmul.f32 %v429, %v427
    %v431 = vsub.f32 %v406, %v430
    %s432 = sld [smem:[#allocation17 + $0x4]]
    %v433 = vadd.f32 %v417, %v427
    %v434 = vstv %s432
    %v435 = vmul.f32 %v434, %v433
    %v436 = vsub.f32 %v411, %v435
    %v437 = vmul.f32 %v431, 1.442695
    %v438 = vpow.pop %v437
    %v439 = vmul.f32 %v436, 1.442695
    %v440 = vpow.pop %v439
    %v441 = vsub.f32 1.0, %v440
    %v442 = vstv %s136
    %v443 = vmul.f32 %v442, %v438
    %s444 = ssub.f32 1.0, %s136
    %v445 = vstv %s444
    %v446 = vmul.f32 %v445, %v441
    %v447 = vadd.f32 %v443, %v446
    %v448 = vstv %s137
    %v449 = vadd.f32 %v447, %v448
    %v450 = vmul.f32 %v449, 1.442695
    %v451 = vpow.pop %v450
    %452 = vst [vmem:[#allocation18] sm:$0xff] %v451
    // Predicated region
    $region74: #{tpu_custom_call.1} parent=1 // pred_check
      _
    $region75: #{tpu_custom_call.1} parent=1 // pred_check_branch
      %454 = sbr.rel (0) target = $region77
    $region76: #{tpu_custom_call.1} parent=1 // pred_region
      %456 = vsyncadd [#allocation6], 0
      %s458 = sshll.u32 [#allocation18], 4
      %s459 = int_to_ptr.vmem [resolvable:$true] %s458
      %s460 = sshll.u32 %s10, 4
      %s461 = int_to_ptr.hbm [resolvable:$true] %s460
      %463 = dma.vmem_to_hbm [thread:$0]  %s459, 128, %s461, [#allocation6]
    $region77: #{tpu_custom_call.1} parent=1 // pred_fallthru
      _
    // Predicated region
    $region78: #{tpu_custom_call.1} parent=1 // pred_check
      _
    $region79: #{tpu_custom_call.1} parent=1 // pred_check_branch
      %465 = sbr.rel (0) target = $region81
    $region80: #{tpu_custom_call.1} parent=1 // pred_region
      %467 = dma.done [#allocation6], 128
    $region81: #{tpu_custom_call.1} parent=1 // pred_fallthru
      _
    %468 = vsyncpa [#allocation5], 1
    %469 = vsyncpa [#allocation6], 1
    %470 = vsyncpa [#allocation7], 1
    %471 = vsyncpa [#allocation10], 1
    %472 = vsyncpa [#allocation13], 1
    %473 = vsyncpa [#allocation16], 1

</llo_original>
